<compile_context>
chip_gen: v5e
topology: v5e:2x2
jax: 0.10.0
libtpu: 0.0.40
codegen_flags: <defaults>
</compile_context>

<pallas_src>
import jax
import jax.numpy as jnp
from jax.experimental import pallas as pl
from jax.experimental.pallas import tpu as pltpu


def _round_up(x, m):
    return ((x + m - 1) // m) * m


def _make_mlp_kernel(num_layers, tanh_flags, compute_dtype):
    """Fused chain of `num_layers` linear layers; tanh applied where tanh_flags[i] is True."""

    def kernel(*refs):
        x_ref = refs[0]
        out_ref = refs[-1]
        h = x_ref[...]                                   # f32 (TILE_B, d_in)
        for i in range(num_layers):
            w = refs[1 + 2 * i][...]                     # (din_p, dout_p)  bf16, == PyTorch W.T (padded)
            b = refs[2 + 2 * i][...]                     # (1, dout_p)      f32
            h = jnp.dot(h.astype(compute_dtype), w,
                        preferred_element_type=jnp.float32) + b     # MXU bf16, f32 accumulate
            if tanh_flags[i]:
                h = jnp.tanh(h)                          # f32 elementwise (v5e-friendly)
        out_ref[...] = h.astype(out_ref.dtype)

    return kernel


def init_params(key, seq_len, num_nodes, kernel_list, hid_dim):
    """Deterministic logical (f32, unpadded) parameters; shapes follow the module __init__."""
    hidden = num_nodes * hid_dim
    assert kernel_list[-1] == hidden, "kernel_list[-1] must equal num_nodes * hid_dim"
    d_io = seq_len * num_nodes

    dims_enc = [d_io] + list(kernel_list)
    dims_dec = list(reversed(kernel_list)) + [d_io]

    layers = []                                          # (din, dout, kind) in execution order
    for i in range(len(dims_enc) - 1):
        layers.append((dims_enc[i], dims_enc[i + 1], "enc"))
    for _ in range(3):
        layers.append((hidden, hidden, "fc"))
    for i in range(len(dims_dec) - 1):
        layers.append((dims_dec[i], dims_dec[i + 1], "dec"))

    keys = jax.random.split(key, len(layers))
    params = []
    for k, (din, dout, kind) in zip(keys, layers):
        kw, kb = jax.random.split(k)
        w = 0.1 * jax.random.normal(kw, (din, dout), jnp.float32)    # stored as (in, out) == W.T
        b = 0.01 * jax.random.normal(kb, (1, dout), jnp.float32)
        params.append((w, b, kind))
    return params


def pack_kernel_params(params, *, d_in, lane=128, compute_dtype=jnp.bfloat16):
    """Zero-pad intermediate widths up to `lane` and cast weights to the MXU compute dtype.

    Padding is exact: padded activation lanes are identically 0 through linear layers and tanh.
    Input width (d_in) and final output width stay at their real sizes.
    """
    n = len(params)
    pdims = [d_in]
    for idx, (w, _, _) in enumerate(params):
        dout = w.shape[1]
        pdims.append(dout if idx == n - 1 else _round_up(dout, lane))

    kparams = []
    for idx, (w, b, _) in enumerate(params):
        din, dout = w.shape
        pdin, pdout = pdims[idx], pdims[idx + 1]
        wk = jnp.zeros((pdin, pdout), compute_dtype).at[:din, :dout].set(w.astype(compute_dtype))
        bk = jnp.zeros((1, pdout), jnp.float32).at[:, :dout].set(b)
        kparams.append((wk, bk))
    return kparams


def mlp_predict_forward(inputs, params, *, train_len, num_nodes, act=False,
                        tile_b=128, compute_dtype=jnp.bfloat16):
    """Pallas-backed forward. inputs: (B, dim, num_nodes, seq_len) -> (B, 1, num_nodes, seq_len)."""
    B = inputs.shape[0]
    d_in = train_len * num_nodes
    d_out = d_in

    tanh_flags = tuple(True if kind == "fc" else bool(act) for (_, _, kind) in params)
    kparams = pack_kernel_params(params, d_in=d_in, compute_dtype=compute_dtype)

    # --- input glue: fold channel-0 slice + flatten into the kernel DMA when lane-aligned ---
    if d_in % 128 == 0:
        # Bitcast-reshape (no copy); channel 0 of the row-major flatten occupies columns [0, d_in).
        x2 = inputs.reshape(B, -1).astype(jnp.float32)
    else:
        # TODO(synk): non-lane-aligned d_in falls back to a small host-side slice copy.
        x2 = inputs[:, 0, :, :].reshape(B, d_in).astype(jnp.float32)

    # --- batch tiling (MXU M dimension) ---
    TILE_B = min(tile_b, _round_up(B, 8))                # multiple of 8, up to 128
    B_pad = _round_up(B, TILE_B)
    if B_pad != B:
        x2 = jnp.pad(x2, ((0, B_pad - B), (0, 0)))
    grid = (B_pad // TILE_B,)

    flat_params = []
    in_specs = [pl.BlockSpec((TILE_B, d_in), lambda i: (i, 0))]       # pipelined per batch tile
    for wk, bk in kparams:
        flat_params += [wk, bk]
        in_specs.append(pl.BlockSpec(wk.shape, lambda i: (0, 0)))     # VMEM-resident across grid
        in_specs.append(pl.BlockSpec(bk.shape, lambda i: (0, 0)))
    out_spec = pl.BlockSpec((TILE_B, d_out), lambda i: (i, 0))

    # --- VMEM budget (cap at v7x's 64 MiB physical) ---
    weight_bytes = sum(int(w.size) * w.dtype.itemsize + int(b.size) * b.dtype.itemsize
                       for w, b in kparams)
    max_width = max(max(w.shape) for w, _ in kparams)
    est = (weight_bytes
           + 2 * (TILE_B * d_in * 4 + TILE_B * d_out * 4)             # double-buffered x / out tiles
           + 4 * TILE_B * max(max_width, d_in, d_out) * 4)            # intermediate h headroom
    vmem_limit = int(min(64 * 2**20, max(32 * 2**20, 2 * est)))

    flops = 2 * B_pad * sum(w.shape[0] * w.shape[1] for w, _ in kparams)
    transc = B_pad * sum(w.shape[1] for (w, _), f in zip(kparams, tanh_flags) if f)
    bytes_acc = weight_bytes + B_pad * (d_in + d_out) * 4

    kernel = _make_mlp_kernel(len(kparams), tanh_flags, compute_dtype)

    y = pl.pallas_call(
        kernel,
        out_shape=jax.ShapeDtypeStruct((B_pad, d_out), jnp.float32),
        grid=grid,
        in_specs=in_specs,
        out_specs=out_spec,
        compiler_params=pltpu.CompilerParams(
            dimension_semantics=("parallel",),            # megacore on v7x; free elsewhere
            vmem_limit_bytes=vmem_limit,
        ),
        cost_estimate=pl.CostEstimate(flops=flops, transcendentals=transc,
                                      bytes_accessed=bytes_acc),
    )(x2, *flat_params)

    # glue: torch.reshape(Y, [B, 1, num_nodes, seq_len]) is row-major, same as jnp.reshape
    return y[:B].reshape(B, 1, num_nodes, train_len)


def reference_forward(inputs, params, *, train_len, num_nodes, act=False,
                      matmul_dtype=jnp.float32):
    """Pure-JAX reference (eval-mode PyTorch semantics)."""
    B = inputs.shape[0]
    h = inputs[:, :1, :, :].reshape(B, -1).astype(jnp.float32)
    for w, b, kind in params:
        h = jnp.dot(h.astype(matmul_dtype), w.astype(matmul_dtype),
                    preferred_element_type=jnp.float32) + b
        if kind == "fc" or act:
            h = jnp.tanh(h)
    return h.reshape(B, 1, num_nodes, train_len)


if __name__ == "__main__":
    # Small shapes consistent with the module:
    #   train_len (seq_len) = 8, num_nodes = 16, hid_dim = 2  =>  kernel_list[-1] = 32
    B, DIM, NUM_NODES, TRAIN_LEN = 2, 4, 16, 8
    HID_DIM = 2
    KERNEL_LIST = [64, NUM_NODES * HID_DIM]              # [64, 32]
    ACT = False                                          # module default

    key = jax.random.PRNGKey(0)
    k_in, k_par = jax.random.split(key)
    inputs = jax.random.normal(k_in, (B, DIM, NUM_NODES, TRAIN_LEN), jnp.float32)
    params = init_params(k_par, TRAIN_LEN, NUM_NODES, KERNEL_LIST, HID_DIM)

    out = mlp_predict_forward(inputs, params, train_len=TRAIN_LEN,
                              num_nodes=NUM_NODES, act=ACT)
    out = jax.block_until_ready(out)

    # Same-precision reference (bf16 weights, f32 accumulate) — tight check.
    ref_bf16 = reference_forward(inputs, params, train_len=TRAIN_LEN,
                                 num_nodes=NUM_NODES, act=ACT, matmul_dtype=jnp.bfloat16)
    # Full-f32 PyTorch-faithful reference — loose check (bf16 weight quantization).
    ref_f32 = reference_forward(inputs, params, train_len=TRAIN_LEN,
                                num_nodes=NUM_NODES, act=ACT, matmul_dtype=jnp.float32)

    assert out.shape == (B, 1, NUM_NODES, TRAIN_LEN), out.shape
    assert jnp.allclose(out, ref_bf16, atol=1e-3, rtol=1e-3), \
        float(jnp.max(jnp.abs(out - ref_bf16)))
    assert jnp.allclose(out, ref_f32, atol=3e-2, rtol=3e-2), \
        float(jnp.max(jnp.abs(out - ref_f32)))

    print("KERNEL_OK")
</pallas_src>

<mosaic_0001>
module attributes {stable_mosaic.version = 11 : i64} {
  func.func @kernel(%arg0: i32, %arg1: memref<8x128xf32, #tpu.memory_space<vmem>>, %arg2: memref<128x128xbf16, #tpu.memory_space<vmem>>, %arg3: memref<1x128xf32, #tpu.memory_space<vmem>>, %arg4: memref<128x128xbf16, #tpu.memory_space<vmem>>, %arg5: memref<1x128xf32, #tpu.memory_space<vmem>>, %arg6: memref<128x128xbf16, #tpu.memory_space<vmem>>, %arg7: memref<1x128xf32, #tpu.memory_space<vmem>>, %arg8: memref<128x128xbf16, #tpu.memory_space<vmem>>, %arg9: memref<1x128xf32, #tpu.memory_space<vmem>>, %arg10: memref<128x128xbf16, #tpu.memory_space<vmem>>, %arg11: memref<1x128xf32, #tpu.memory_space<vmem>>, %arg12: memref<128x128xbf16, #tpu.memory_space<vmem>>, %arg13: memref<1x128xf32, #tpu.memory_space<vmem>>, %arg14: memref<128x128xbf16, #tpu.memory_space<vmem>>, %arg15: memref<1x128xf32, #tpu.memory_space<vmem>>, %arg16: memref<8x128xf32, #tpu.memory_space<vmem>>) attributes {dimension_semantics = [#tpu.dimension_semantics<parallel>], iteration_bounds = array<i64: 1>, scalar_prefetch = 0 : i64, scratch_operands = 0 : i64, tpu.core_type = #tpu.core_type<tc>, window_params = [{transform_indices = @transform_0, window_bounds = array<i64: 8, 128>}, {pipeline_mode = #tpu.pipeline_mode<synchronous>, transform_indices = @transform_1, window_bounds = array<i64: 128, 128>}, {pipeline_mode = #tpu.pipeline_mode<synchronous>, transform_indices = @transform_2, window_bounds = array<i64: 1, 128>}, {pipeline_mode = #tpu.pipeline_mode<synchronous>, transform_indices = @transform_3, window_bounds = array<i64: 128, 128>}, {pipeline_mode = #tpu.pipeline_mode<synchronous>, transform_indices = @transform_4, window_bounds = array<i64: 1, 128>}, {pipeline_mode = #tpu.pipeline_mode<synchronous>, transform_indices = @transform_5, window_bounds = array<i64: 128, 128>}, {pipeline_mode = #tpu.pipeline_mode<synchronous>, transform_indices = @transform_6, window_bounds = array<i64: 1, 128>}, {pipeline_mode = #tpu.pipeline_mode<synchronous>, transform_indices = @transform_7, window_bounds = array<i64: 128, 128>}, {pipeline_mode = #tpu.pipeline_mode<synchronous>, transform_indices = @transform_8, window_bounds = array<i64: 1, 128>}, {pipeline_mode = #tpu.pipeline_mode<synchronous>, transform_indices = @transform_9, window_bounds = array<i64: 128, 128>}, {pipeline_mode = #tpu.pipeline_mode<synchronous>, transform_indices = @transform_10, window_bounds = array<i64: 1, 128>}, {pipeline_mode = #tpu.pipeline_mode<synchronous>, transform_indices = @transform_11, window_bounds = array<i64: 128, 128>}, {pipeline_mode = #tpu.pipeline_mode<synchronous>, transform_indices = @transform_12, window_bounds = array<i64: 1, 128>}, {pipeline_mode = #tpu.pipeline_mode<synchronous>, transform_indices = @transform_13, window_bounds = array<i64: 128, 128>}, {pipeline_mode = #tpu.pipeline_mode<synchronous>, transform_indices = @transform_14, window_bounds = array<i64: 1, 128>}, {transform_indices = @transform_15, window_bounds = array<i64: 8, 128>}]} {
    %c0 = arith.constant 0 : index
    %c0_0 = arith.constant 0 : index
    %0 = vector.load %arg1[%c0, %c0_0] : memref<8x128xf32, #tpu.memory_space<vmem>>, vector<8x128xf32>
    %c0_1 = arith.constant 0 : index
    %c0_2 = arith.constant 0 : index
    %1 = vector.load %arg2[%c0_1, %c0_2] : memref<128x128xbf16, #tpu.memory_space<vmem>>, vector<128x128xbf16>
    %c0_3 = arith.constant 0 : index
    %c0_4 = arith.constant 0 : index
    %2 = vector.load %arg3[%c0_3, %c0_4] : memref<1x128xf32, #tpu.memory_space<vmem>>, vector<1x128xf32>
    %3 = arith.truncf %0 : vector<8x128xf32> to vector<8x128xbf16>
    %cst = arith.constant dense<0.000000e+00> : vector<8x128xf32>
    %4 = tpu.matmul %3, %1, %cst {dimension_numbers = #tpu.dot_dimension_numbers<[1], [0], [0], [1], [0, 0, 1, 1], [], []>} : vector<8x128xbf16>, vector<128x128xbf16>, vector<8x128xf32> -> vector<8x128xf32>
    %5 = vector.broadcast %2 : vector<1x128xf32> to vector<8x128xf32>
    %6 = arith.addf %4, %5 : vector<8x128xf32>
    %c0_5 = arith.constant 0 : index
    %c0_6 = arith.constant 0 : index
    %7 = vector.load %arg4[%c0_5, %c0_6] : memref<128x128xbf16, #tpu.memory_space<vmem>>, vector<128x128xbf16>
    %c0_7 = arith.constant 0 : index
    %c0_8 = arith.constant 0 : index
    %8 = vector.load %arg5[%c0_7, %c0_8] : memref<1x128xf32, #tpu.memory_space<vmem>>, vector<1x128xf32>
    %9 = arith.truncf %6 : vector<8x128xf32> to vector<8x128xbf16>
    %cst_9 = arith.constant dense<0.000000e+00> : vector<8x128xf32>
    %10 = tpu.matmul %9, %7, %cst_9 {dimension_numbers = #tpu.dot_dimension_numbers<[1], [0], [0], [1], [0, 0, 1, 1], [], []>} : vector<8x128xbf16>, vector<128x128xbf16>, vector<8x128xf32> -> vector<8x128xf32>
    %11 = vector.broadcast %8 : vector<1x128xf32> to vector<8x128xf32>
    %12 = arith.addf %10, %11 : vector<8x128xf32>
    %c0_10 = arith.constant 0 : index
    %c0_11 = arith.constant 0 : index
    %13 = vector.load %arg6[%c0_10, %c0_11] : memref<128x128xbf16, #tpu.memory_space<vmem>>, vector<128x128xbf16>
    %c0_12 = arith.constant 0 : index
    %c0_13 = arith.constant 0 : index
    %14 = vector.load %arg7[%c0_12, %c0_13] : memref<1x128xf32, #tpu.memory_space<vmem>>, vector<1x128xf32>
    %15 = arith.truncf %12 : vector<8x128xf32> to vector<8x128xbf16>
    %cst_14 = arith.constant dense<0.000000e+00> : vector<8x128xf32>
    %16 = tpu.matmul %15, %13, %cst_14 {dimension_numbers = #tpu.dot_dimension_numbers<[1], [0], [0], [1], [0, 0, 1, 1], [], []>} : vector<8x128xbf16>, vector<128x128xbf16>, vector<8x128xf32> -> vector<8x128xf32>
    %17 = vector.broadcast %14 : vector<1x128xf32> to vector<8x128xf32>
    %18 = arith.addf %16, %17 : vector<8x128xf32>
    %19 = math.tanh %18 : vector<8x128xf32>
    %c0_15 = arith.constant 0 : index
    %c0_16 = arith.constant 0 : index
    %20 = vector.load %arg8[%c0_15, %c0_16] : memref<128x128xbf16, #tpu.memory_space<vmem>>, vector<128x128xbf16>
    %c0_17 = arith.constant 0 : index
    %c0_18 = arith.constant 0 : index
    %21 = vector.load %arg9[%c0_17, %c0_18] : memref<1x128xf32, #tpu.memory_space<vmem>>, vector<1x128xf32>
    %22 = arith.truncf %19 : vector<8x128xf32> to vector<8x128xbf16>
    %cst_19 = arith.constant dense<0.000000e+00> : vector<8x128xf32>
    %23 = tpu.matmul %22, %20, %cst_19 {dimension_numbers = #tpu.dot_dimension_numbers<[1], [0], [0], [1], [0, 0, 1, 1], [], []>} : vector<8x128xbf16>, vector<128x128xbf16>, vector<8x128xf32> -> vector<8x128xf32>
    %24 = vector.broadcast %21 : vector<1x128xf32> to vector<8x128xf32>
    %25 = arith.addf %23, %24 : vector<8x128xf32>
    %26 = math.tanh %25 : vector<8x128xf32>
    %c0_20 = arith.constant 0 : index
    %c0_21 = arith.constant 0 : index
    %27 = vector.load %arg10[%c0_20, %c0_21] : memref<128x128xbf16, #tpu.memory_space<vmem>>, vector<128x128xbf16>
    %c0_22 = arith.constant 0 : index
    %c0_23 = arith.constant 0 : index
    %28 = vector.load %arg11[%c0_22, %c0_23] : memref<1x128xf32, #tpu.memory_space<vmem>>, vector<1x128xf32>
    %29 = arith.truncf %26 : vector<8x128xf32> to vector<8x128xbf16>
    %cst_24 = arith.constant dense<0.000000e+00> : vector<8x128xf32>
    %30 = tpu.matmul %29, %27, %cst_24 {dimension_numbers = #tpu.dot_dimension_numbers<[1], [0], [0], [1], [0, 0, 1, 1], [], []>} : vector<8x128xbf16>, vector<128x128xbf16>, vector<8x128xf32> -> vector<8x128xf32>
    %31 = vector.broadcast %28 : vector<1x128xf32> to vector<8x128xf32>
    %32 = arith.addf %30, %31 : vector<8x128xf32>
    %33 = math.tanh %32 : vector<8x128xf32>
    %c0_25 = arith.constant 0 : index
    %c0_26 = arith.constant 0 : index
    %34 = vector.load %arg12[%c0_25, %c0_26] : memref<128x128xbf16, #tpu.memory_space<vmem>>, vector<128x128xbf16>
    %c0_27 = arith.constant 0 : index
    %c0_28 = arith.constant 0 : index
    %35 = vector.load %arg13[%c0_27, %c0_28] : memref<1x128xf32, #tpu.memory_space<vmem>>, vector<1x128xf32>
    %36 = arith.truncf %33 : vector<8x128xf32> to vector<8x128xbf16>
    %cst_29 = arith.constant dense<0.000000e+00> : vector<8x128xf32>
    %37 = tpu.matmul %36, %34, %cst_29 {dimension_numbers = #tpu.dot_dimension_numbers<[1], [0], [0], [1], [0, 0, 1, 1], [], []>} : vector<8x128xbf16>, vector<128x128xbf16>, vector<8x128xf32> -> vector<8x128xf32>
    %38 = vector.broadcast %35 : vector<1x128xf32> to vector<8x128xf32>
    %39 = arith.addf %37, %38 : vector<8x128xf32>
    %c0_30 = arith.constant 0 : index
    %c0_31 = arith.constant 0 : index
    %40 = vector.load %arg14[%c0_30, %c0_31] : memref<128x128xbf16, #tpu.memory_space<vmem>>, vector<128x128xbf16>
    %c0_32 = arith.constant 0 : index
    %c0_33 = arith.constant 0 : index
    %41 = vector.load %arg15[%c0_32, %c0_33] : memref<1x128xf32, #tpu.memory_space<vmem>>, vector<1x128xf32>
    %42 = arith.truncf %39 : vector<8x128xf32> to vector<8x128xbf16>
    %cst_34 = arith.constant dense<0.000000e+00> : vector<8x128xf32>
    %43 = tpu.matmul %42, %40, %cst_34 {dimension_numbers = #tpu.dot_dimension_numbers<[1], [0], [0], [1], [0, 0, 1, 1], [], []>} : vector<8x128xbf16>, vector<128x128xbf16>, vector<8x128xf32> -> vector<8x128xf32>
    %44 = vector.broadcast %41 : vector<1x128xf32> to vector<8x128xf32>
    %45 = arith.addf %43, %44 : vector<8x128xf32>
    %c0_35 = arith.constant 0 : index
    %c0_36 = arith.constant 0 : index
    %46 = vector.load %arg16[%c0_35, %c0_36] : memref<8x128xf32, #tpu.memory_space<vmem>>, vector<8x128xf32>
    tpu.vector_store %arg16[%c0_35, %c0_36], %45 {strides = array<i32>} : memref<8x128xf32, #tpu.memory_space<vmem>>, vector<8x128xf32>,
    return
  }
  func.func @transform_0(%arg0: i32) -> (i32, i32) {
    %c0_i32 = arith.constant 0 : i32
    %c0_i32_0 = arith.constant 0 : i32
    return %arg0, %c0_i32 : i32, i32
  }
  func.func @transform_1(%arg0: i32) -> (i32, i32) {
    %c0_i32 = arith.constant 0 : i32
    %c0_i32_0 = arith.constant 0 : i32
    %c0_i32_1 = arith.constant 0 : i32
    return %c0_i32, %c0_i32_0 : i32, i32
  }
  func.func @transform_2(%arg0: i32) -> (i32, i32) {
    %c0_i32 = arith.constant 0 : i32
    %c0_i32_0 = arith.constant 0 : i32
    %c0_i32_1 = arith.constant 0 : i32
    return %c0_i32, %c0_i32_0 : i32, i32
  }
  func.func @transform_3(%arg0: i32) -> (i32, i32) {
    %c0_i32 = arith.constant 0 : i32
    %c0_i32_0 = arith.constant 0 : i32
    %c0_i32_1 = arith.constant 0 : i32
    return %c0_i32, %c0_i32_0 : i32, i32
  }
  func.func @transform_4(%arg0: i32) -> (i32, i32) {
    %c0_i32 = arith.constant 0 : i32
    %c0_i32_0 = arith.constant 0 : i32
    %c0_i32_1 = arith.constant 0 : i32
    return %c0_i32, %c0_i32_0 : i32, i32
  }
  func.func @transform_5(%arg0: i32) -> (i32, i32) {
    %c0_i32 = arith.constant 0 : i32
    %c0_i32_0 = arith.constant 0 : i32
    %c0_i32_1 = arith.constant 0 : i32
    return %c0_i32, %c0_i32_0 : i32, i32
  }
  func.func @transform_6(%arg0: i32) -> (i32, i32) {
    %c0_i32 = arith.constant 0 : i32
    %c0_i32_0 = arith.constant 0 : i32
    %c0_i32_1 = arith.constant 0 : i32
    return %c0_i32, %c0_i32_0 : i32, i32
  }
  func.func @transform_7(%arg0: i32) -> (i32, i32) {
    %c0_i32 = arith.constant 0 : i32
    %c0_i32_0 = arith.constant 0 : i32
    %c0_i32_1 = arith.constant 0 : i32
    return %c0_i32, %c0_i32_0 : i32, i32
  }
  func.func @transform_8(%arg0: i32) -> (i32, i32) {
    %c0_i32 = arith.constant 0 : i32
    %c0_i32_0 = arith.constant 0 : i32
    %c0_i32_1 = arith.constant 0 : i32
    return %c0_i32, %c0_i32_0 : i32, i32
  }
  func.func @transform_9(%arg0: i32) -> (i32, i32) {
    %c0_i32 = arith.constant 0 : i32
    %c0_i32_0 = arith.constant 0 : i32
    %c0_i32_1 = arith.constant 0 : i32
    return %c0_i32, %c0_i32_0 : i32, i32
  }
  func.func @transform_10(%arg0: i32) -> (i32, i32) {
    %c0_i32 = arith.constant 0 : i32
    %c0_i32_0 = arith.constant 0 : i32
    %c0_i32_1 = arith.constant 0 : i32
    return %c0_i32, %c0_i32_0 : i32, i32
  }
  func.func @transform_11(%arg0: i32) -> (i32, i32) {
    %c0_i32 = arith.constant 0 : i32
    %c0_i32_0 = arith.constant 0 : i32
    %c0_i32_1 = arith.constant 0 : i32
    return %c0_i32, %c0_i32_0 : i32, i32
  }
  func.func @transform_12(%arg0: i32) -> (i32, i32) {
    %c0_i32 = arith.constant 0 : i32
    %c0_i32_0 = arith.constant 0 : i32
    %c0_i32_1 = arith.constant 0 : i32
    return %c0_i32, %c0_i32_0 : i32, i32
  }
  func.func @transform_13(%arg0: i32) -> (i32, i32) {
    %c0_i32 = arith.constant 0 : i32
    %c0_i32_0 = arith.constant 0 : i32
    %c0_i32_1 = arith.constant 0 : i32
    return %c0_i32, %c0_i32_0 : i32, i32
  }
  func.func @transform_14(%arg0: i32) -> (i32, i32) {
    %c0_i32 = arith.constant 0 : i32
    %c0_i32_0 = arith.constant 0 : i32
    %c0_i32_1 = arith.constant 0 : i32
    return %c0_i32, %c0_i32_0 : i32, i32
  }
  func.func @transform_15(%arg0: i32) -> (i32, i32) {
    %c0_i32 = arith.constant 0 : i32
    %c0_i32_0 = arith.constant 0 : i32
    return %arg0, %c0_i32 : i32, i32
  }
}

</mosaic_0001>

<llo_original>
// kernel: tpu_custom_call.1
$region0: #{tpu_custom_call.1}
  #allocation0 [shape = 'u32[]', space=smem, size = 0x4, offset = 0x4, fixed_abs, tag = 'smem constant byte address 0x4 - core index']
  #allocation1 [shape = 'u32[72,128]{1,0:T(1,128)}', space=vmem, size = 0x9000, scoped, tag = 'internal scratch']
  %s0 = inlined_call_operand.hbm [shape: f32[8,512], index: 0, kind: input, shape index: {}]
  %s1 = inlined_call_operand.hbm [shape: bf16[128,128], index: 1, kind: input, shape index: {}]
  %s2 = inlined_call_operand.vmem [shape: f32[1,128], index: 2, kind: input, shape index: {}]
  %s3 = inlined_call_operand.hbm [shape: bf16[128,128], index: 3, kind: input, shape index: {}]
  %s4 = inlined_call_operand.vmem [shape: f32[1,128], index: 4, kind: input, shape index: {}]
  %s5 = inlined_call_operand.hbm [shape: bf16[128,128], index: 5, kind: input, shape index: {}]
  %s6 = inlined_call_operand.vmem [shape: f32[1,128], index: 6, kind: input, shape index: {}]
  %s7 = inlined_call_operand.hbm [shape: bf16[128,128], index: 7, kind: input, shape index: {}]
  %s8 = inlined_call_operand.vmem [shape: f32[1,128], index: 8, kind: input, shape index: {}]
  %s9 = inlined_call_operand.hbm [shape: bf16[128,128], index: 9, kind: input, shape index: {}]
  %s10 = inlined_call_operand.vmem [shape: f32[1,128], index: 10, kind: input, shape index: {}]
  %s11 = inlined_call_operand.hbm [shape: bf16[128,128], index: 11, kind: input, shape index: {}]
  %s12 = inlined_call_operand.vmem [shape: f32[1,128], index: 12, kind: input, shape index: {}]
  %s13 = inlined_call_operand.hbm [shape: bf16[128,128], index: 13, kind: input, shape index: {}]
  %s14 = inlined_call_operand.vmem [shape: f32[1,128], index: 14, kind: input, shape index: {}]
  %s15 = inlined_call_operand.hbm [shape: f32[8,128], index: 15, kind: output, shape index: {}]
  %s16 = sld [smem:[#allocation0]]
  $region102: #{tpu_custom_call.1} parent=0
    _
  %s18 = ssub.s32 1, %s16
  %s19 = scalar_select 0, %s18, %s16
  $region1: #{tpu_custom_call.1} parent=0
    #allocation2 [shape = 'u8[4096]{0}', space=vmem, size = 0x1000, scoped, tag = 'input window, operand 0, single buffered']
    #allocation3 [shape = 's32[1]{0}', space=sflag, size = 0x4, scoped, tag = 'scoped memory for tpu_custom_call.1']
    #allocation4 [shape = 's32[1]{0}', space=sflag, size = 0x4, scoped, tag = 'scoped memory for tpu_custom_call.1']
    #allocation5 [shape = 'u8[32768]{0}', space=vmem, size = 0x8000, scoped, tag = 'input window, operand 1, single buffered']
    #allocation6 [shape = 's32[1]{0}', space=sflag, size = 0x4, scoped, tag = 'scoped memory for tpu_custom_call.1']
    #allocation7 [shape = 'u8[32768]{0}', space=vmem, size = 0x8000, scoped, tag = 'input window, operand 3, single buffered']
    #allocation8 [shape = 'u8[32768]{0}', space=vmem, size = 0x8000, scoped, tag = 'input window, operand 5, single buffered']
    #allocation9 [shape = 's32[1]{0}', space=sflag, size = 0x4, scoped, tag = 'scoped memory for tpu_custom_call.1']
    #allocation10 [shape = 'u8[32768]{0}', space=vmem, size = 0x8000, scoped, tag = 'input window, operand 7, single buffered']
    #allocation11 [shape = 'u8[32768]{0}', space=vmem, size = 0x8000, scoped, tag = 'input window, operand 9, single buffered']
    #allocation12 [shape = 's32[1]{0}', space=sflag, size = 0x4, scoped, tag = 'scoped memory for tpu_custom_call.1']
    #allocation13 [shape = 'u8[32768]{0}', space=vmem, size = 0x8000, scoped, tag = 'input window, operand 11, single buffered']
    #allocation14 [shape = 'u8[32768]{0}', space=vmem, size = 0x8000, scoped, tag = 'input window, operand 13, single buffered']
    #allocation15 [shape = 's32[1]{0}', space=sflag, size = 0x4, scoped, tag = 'scoped memory for tpu_custom_call.1']
    #allocation16 [shape = 'u8[4096]{0}', space=vmem, size = 0x1000, scoped, tag = 'output window, operand 0, single buffered']
    %20 = vsyncpa [#allocation3], 0
    %21 = vsyncpa [#allocation6], 0
    %22 = vsyncpa [#allocation9], 0
    %23 = vsyncpa [#allocation12], 0
    %24 = vsyncpa [#allocation15], 0
    %25 = vsyncpa [#allocation4], 0
    // Predicated region
    $region2: #{tpu_custom_call.1} parent=1 // pred_check
      _
    $region3: #{tpu_custom_call.1} parent=1 // pred_check_branch
      %27 = sbr.rel (0) target = $region5
    $region4: #{tpu_custom_call.1} parent=1 // pred_region
      %29 = vsyncadd [#allocation3], 0
      %s31 = sshll.u32 %s0, 4
      %s32 = int_to_ptr.hbm [resolvable:$true] %s31
      %s33 = sshll.u32 [#allocation2], 4
      %s34 = int_to_ptr.vmem [resolvable:$true] %s33
      %36 = dma.hbm_to_vmem [thread:$0]  %s32, 128, %s34, [#allocation3]
    $region5: #{tpu_custom_call.1} parent=1 // pred_fallthru
      _
    // Predicated region
    $region6: #{tpu_custom_call.1} parent=1 // pred_check
      _
    $region7: #{tpu_custom_call.1} parent=1 // pred_check_branch
      %38 = sbr.rel (0) target = $region9
    $region8: #{tpu_custom_call.1} parent=1 // pred_region
      %40 = vsyncadd [#allocation6], 0
      %s41 = sshll.u32 %s1, 4
      %s42 = int_to_ptr.hbm [resolvable:$true] %s41
      %s43 = sshll.u32 [#allocation5], 4
      %s44 = int_to_ptr.vmem [resolvable:$true] %s43
      %49 = dma.hbm_to_vmem [thread:$0]  %s42, 1024, %s44, [#allocation6], 64, 64, 4
    $region9: #{tpu_custom_call.1} parent=1 // pred_fallthru
      _
    // Predicated region
    $region10: #{tpu_custom_call.1} parent=1 // pred_check
      _
    $region11: #{tpu_custom_call.1} parent=1 // pred_check_branch
      %51 = sbr.rel (0) target = $region13
    $region12: #{tpu_custom_call.1} parent=1 // pred_region
      _
    $region13: #{tpu_custom_call.1} parent=1 // pred_fallthru
      _
    // Predicated region
    $region14: #{tpu_custom_call.1} parent=1 // pred_check
      _
    $region15: #{tpu_custom_call.1} parent=1 // pred_check_branch
      %53 = sbr.rel (0) target = $region17
    $region16: #{tpu_custom_call.1} parent=1 // pred_region
      %55 = vsyncadd [#allocation6], 0
      %s56 = sshll.u32 %s3, 4
      %s57 = int_to_ptr.hbm [resolvable:$true] %s56
      %s58 = sshll.u32 [#allocation7], 4
      %s59 = int_to_ptr.vmem [resolvable:$true] %s58
      %64 = dma.hbm_to_vmem [thread:$0]  %s57, 1024, %s59, [#allocation6], 64, 64, 4
    $region17: #{tpu_custom_call.1} parent=1 // pred_fallthru
      _
    // Predicated region
    $region18: #{tpu_custom_call.1} parent=1 // pred_check
      _
    $region19: #{tpu_custom_call.1} parent=1 // pred_check_branch
      %66 = sbr.rel (0) target = $region21
    $region20: #{tpu_custom_call.1} parent=1 // pred_region
      _
    $region21: #{tpu_custom_call.1} parent=1 // pred_fallthru
      _
    // Predicated region
    $region22: #{tpu_custom_call.1} parent=1 // pred_check
      _
    $region23: #{tpu_custom_call.1} parent=1 // pred_check_branch
      %68 = sbr.rel (0) target = $region25
    $region24: #{tpu_custom_call.1} parent=1 // pred_region
      %70 = vsyncadd [#allocation9], 0
      %s71 = sshll.u32 %s5, 4
      %s72 = int_to_ptr.hbm [resolvable:$true] %s71
      %s73 = sshll.u32 [#allocation8], 4
      %s74 = int_to_ptr.vmem [resolvable:$true] %s73
      %79 = dma.hbm_to_vmem [thread:$0]  %s72, 1024, %s74, [#allocation9], 64, 64, 4
    $region25: #{tpu_custom_call.1} parent=1 // pred_fallthru
      _
    // Predicated region
    $region26: #{tpu_custom_call.1} parent=1 // pred_check
      _
    $region27: #{tpu_custom_call.1} parent=1 // pred_check_branch
      %81 = sbr.rel (0) target = $region29
    $region28: #{tpu_custom_call.1} parent=1 // pred_region
      _
    $region29: #{tpu_custom_call.1} parent=1 // pred_fallthru
      _
    // Predicated region
    $region30: #{tpu_custom_call.1} parent=1 // pred_check
      _
    $region31: #{tpu_custom_call.1} parent=1 // pred_check_branch
      %83 = sbr.rel (0) target = $region33
    $region32: #{tpu_custom_call.1} parent=1 // pred_region
      %85 = vsyncadd [#allocation9], 0
      %s86 = sshll.u32 %s7, 4
      %s87 = int_to_ptr.hbm [resolvable:$true] %s86
      %s88 = sshll.u32 [#allocation10], 4
      %s89 = int_to_ptr.vmem [resolvable:$true] %s88
      %94 = dma.hbm_to_vmem [thread:$0]  %s87, 1024, %s89, [#allocation9], 64, 64, 4
    $region33: #{tpu_custom_call.1} parent=1 // pred_fallthru
      _
    // Predicated region
    $region34: #{tpu_custom_call.1} parent=1 // pred_check
      _
    $region35: #{tpu_custom_call.1} parent=1 // pred_check_branch
      %96 = sbr.rel (0) target = $region37
    $region36: #{tpu_custom_call.1} parent=1 // pred_region
      _
    $region37: #{tpu_custom_call.1} parent=1 // pred_fallthru
      _
    // Predicated region
    $region38: #{tpu_custom_call.1} parent=1 // pred_check
      _
    $region39: #{tpu_custom_call.1} parent=1 // pred_check_branch
      %98 = sbr.rel (0) target = $region41
    $region40: #{tpu_custom_call.1} parent=1 // pred_region
      %100 = vsyncadd [#allocation12], 0
      %s101 = sshll.u32 %s9, 4
      %s102 = int_to_ptr.hbm [resolvable:$true] %s101
      %s103 = sshll.u32 [#allocation11], 4
      %s104 = int_to_ptr.vmem [resolvable:$true] %s103
      %109 = dma.hbm_to_vmem [thread:$0]  %s102, 1024, %s104, [#allocation12], 64, 64, 4
    $region41: #{tpu_custom_call.1} parent=1 // pred_fallthru
      _
    // Predicated region
    $region42: #{tpu_custom_call.1} parent=1 // pred_check
      _
    $region43: #{tpu_custom_call.1} parent=1 // pred_check_branch
      %111 = sbr.rel (0) target = $region45
    $region44: #{tpu_custom_call.1} parent=1 // pred_region
      _
    $region45: #{tpu_custom_call.1} parent=1 // pred_fallthru
      _
    // Predicated region
    $region46: #{tpu_custom_call.1} parent=1 // pred_check
      _
    $region47: #{tpu_custom_call.1} parent=1 // pred_check_branch
      %113 = sbr.rel (0) target = $region49
    $region48: #{tpu_custom_call.1} parent=1 // pred_region
      %115 = vsyncadd [#allocation12], 0
      %s116 = sshll.u32 %s11, 4
      %s117 = int_to_ptr.hbm [resolvable:$true] %s116
      %s118 = sshll.u32 [#allocation13], 4
      %s119 = int_to_ptr.vmem [resolvable:$true] %s118
      %124 = dma.hbm_to_vmem [thread:$0]  %s117, 1024, %s119, [#allocation12], 64, 64, 4
    $region49: #{tpu_custom_call.1} parent=1 // pred_fallthru
      _
    // Predicated region
    $region50: #{tpu_custom_call.1} parent=1 // pred_check
      _
    $region51: #{tpu_custom_call.1} parent=1 // pred_check_branch
      %126 = sbr.rel (0) target = $region53
    $region52: #{tpu_custom_call.1} parent=1 // pred_region
      _
    $region53: #{tpu_custom_call.1} parent=1 // pred_fallthru
      _
    // Predicated region
    $region54: #{tpu_custom_call.1} parent=1 // pred_check
      _
    $region55: #{tpu_custom_call.1} parent=1 // pred_check_branch
      %128 = sbr.rel (0) target = $region57
    $region56: #{tpu_custom_call.1} parent=1 // pred_region
      %130 = vsyncadd [#allocation15], 0
      %s131 = sshll.u32 %s13, 4
      %s132 = int_to_ptr.hbm [resolvable:$true] %s131
      %s133 = sshll.u32 [#allocation14], 4
      %s134 = int_to_ptr.vmem [resolvable:$true] %s133
      %139 = dma.hbm_to_vmem [thread:$0]  %s132, 1024, %s134, [#allocation15], 64, 64, 4
    $region57: #{tpu_custom_call.1} parent=1 // pred_fallthru
      _
    // Predicated region
    $region58: #{tpu_custom_call.1} parent=1 // pred_check
      _
    $region59: #{tpu_custom_call.1} parent=1 // pred_check_branch
      %141 = sbr.rel (0) target = $region61
    $region60: #{tpu_custom_call.1} parent=1 // pred_region
      _
    $region61: #{tpu_custom_call.1} parent=1 // pred_fallthru
      _
    // Predicated region
    $region62: #{tpu_custom_call.1} parent=1 // pred_check
      _
    $region63: #{tpu_custom_call.1} parent=1 // pred_check_branch
      %143 = sbr.rel (0) target = $region65
    $region64: #{tpu_custom_call.1} parent=1 // pred_region
      %145 = dma.done [#allocation3], 128
    $region65: #{tpu_custom_call.1} parent=1 // pred_fallthru
      _
    // Predicated region
    $region66: #{tpu_custom_call.1} parent=1 // pred_check
      _
    $region67: #{tpu_custom_call.1} parent=1 // pred_check_branch
      %147 = sbr.rel (0) target = $region69
    $region68: #{tpu_custom_call.1} parent=1 // pred_region
      %149 = dma.done [#allocation6], 1024
    $region69: #{tpu_custom_call.1} parent=1 // pred_fallthru
      _
    // Predicated region
    $region70: #{tpu_custom_call.1} parent=1 // pred_check
      _
    $region71: #{tpu_custom_call.1} parent=1 // pred_check_branch
      %151 = sbr.rel (0) target = $region73
    $region72: #{tpu_custom_call.1} parent=1 // pred_region
      %153 = dma.done [#allocation6], 1024
    $region73: #{tpu_custom_call.1} parent=1 // pred_fallthru
      _
    // Predicated region
    $region74: #{tpu_custom_call.1} parent=1 // pred_check
      _
    $region75: #{tpu_custom_call.1} parent=1 // pred_check_branch
      %155 = sbr.rel (0) target = $region77
    $region76: #{tpu_custom_call.1} parent=1 // pred_region
      %157 = dma.done [#allocation9], 1024
    $region77: #{tpu_custom_call.1} parent=1 // pred_fallthru
      _
    // Predicated region
    $region78: #{tpu_custom_call.1} parent=1 // pred_check
      _
    $region79: #{tpu_custom_call.1} parent=1 // pred_check_branch
      %159 = sbr.rel (0) target = $region81
    $region80: #{tpu_custom_call.1} parent=1 // pred_region
      %161 = dma.done [#allocation9], 1024
    $region81: #{tpu_custom_call.1} parent=1 // pred_fallthru
      _
    // Predicated region
    $region82: #{tpu_custom_call.1} parent=1 // pred_check
      _
    $region83: #{tpu_custom_call.1} parent=1 // pred_check_branch
      %163 = sbr.rel (0) target = $region85
    $region84: #{tpu_custom_call.1} parent=1 // pred_region
      %165 = dma.done [#allocation12], 1024
    $region85: #{tpu_custom_call.1} parent=1 // pred_fallthru
      _
    // Predicated region
    $region86: #{tpu_custom_call.1} parent=1 // pred_check
      _
    $region87: #{tpu_custom_call.1} parent=1 // pred_check_branch
      %167 = sbr.rel (0) target = $region89
    $region88: #{tpu_custom_call.1} parent=1 // pred_region
      %169 = dma.done [#allocation12], 1024
    $region89: #{tpu_custom_call.1} parent=1 // pred_fallthru
      _
    // Predicated region
    $region90: #{tpu_custom_call.1} parent=1 // pred_check
      _
    $region91: #{tpu_custom_call.1} parent=1 // pred_check_branch
      %171 = sbr.rel (0) target = $region93
    $region92: #{tpu_custom_call.1} parent=1 // pred_region
      %173 = dma.done [#allocation15], 1024
    $region93: #{tpu_custom_call.1} parent=1 // pred_fallthru
      _
    %v174 = vld [vmem:[#allocation2] sm:$0xff]
    %v175 = vld [vmem:[#allocation5] sm:$0xf]
    %v176 = vld [vmem:[#allocation5 + $0x4] sm:$0xf]
    %v177 = vld [vmem:[#allocation5 + $0x8] sm:$0xf]
    %v178 = vld [vmem:[#allocation5 + $0xc] sm:$0xf]
    %v179 = vld [vmem:[#allocation5 + $0x10] sm:$0xf]
    %v180 = vld [vmem:[#allocation5 + $0x14] sm:$0xf]
    %v181 = vld [vmem:[#allocation5 + $0x18] sm:$0xf]
    %v182 = vld [vmem:[#allocation5 + $0x1c] sm:$0xf]
    %v183 = vld [vmem:[#allocation5 + $0x20] sm:$0xf]
    %v184 = vld [vmem:[#allocation5 + $0x24] sm:$0xf]
    %v185 = vld [vmem:[#allocation5 + $0x28] sm:$0xf]
    %v186 = vld [vmem:[#allocation5 + $0x2c] sm:$0xf]
    %v187 = vld [vmem:[#allocation5 + $0x30] sm:$0xf]
    %v188 = vld [vmem:[#allocation5 + $0x34] sm:$0xf]
    %v189 = vld [vmem:[#allocation5 + $0x38] sm:$0xf]
    %v190 = vld [vmem:[#allocation5 + $0x3c] sm:$0xf]
    %v191 = vld [vmem:[%s2] sm:$0x1]
    %v192 = vpack.c.bf16 %v174, %v174
    %v194 = vperm.slane %v191, 0
    %v212 = vunpack.c.l.b16 %v175
    %v213 = vunpack.c.l.b16 %v176
    %v214 = vunpack.c.l.b16 %v177
    %v215 = vunpack.c.l.b16 %v178
    %v216 = vunpack.c.l.b16 %v179
    %v217 = vunpack.c.l.b16 %v180
    %v218 = vunpack.c.l.b16 %v181
    %v219 = vunpack.c.l.b16 %v182
    %v220 = vunpack.c.l.b16 %v183
    %v221 = vunpack.c.l.b16 %v184
    %v222 = vunpack.c.l.b16 %v185
    %v223 = vunpack.c.l.b16 %v186
    %v224 = vunpack.c.l.b16 %v187
    %v225 = vunpack.c.l.b16 %v188
    %v226 = vunpack.c.l.b16 %v189
    %v227 = vunpack.c.l.b16 %v190
    %v228 = vpack.c.b16 %v213, %v212
    %v229 = vpack.c.b16 %v215, %v214
    %v230 = vpack.c.b16 %v217, %v216
    %v231 = vpack.c.b16 %v219, %v218
    %v232 = vpack.c.b16 %v221, %v220
    %v233 = vpack.c.b16 %v223, %v222
    %v234 = vpack.c.b16 %v225, %v224
    %v235 = vpack.c.b16 %v227, %v226
    %244 = vmatpush.bf16.msra.mxu0 %v235
    %245 = vmatpush.bf16.msra.mxu0 %v234
    %246 = vmatpush.bf16.msra.mxu0 %v233
    %247 = vmatpush.bf16.msra.mxu0 %v232
    %248 = vmatpush.bf16.msra.mxu0 %v231
    %249 = vmatpush.bf16.msra.mxu0 %v230
    %250 = vmatpush.bf16.msra.mxu0 %v229
    %251 = vmatpush.bf16.msra.mxu0 %v228
    %252 = vmatmul.bf16.gmra.mxu0 %v192
    %v253 = vpop.f32.mrf.mxu0
    %v254 = vadd.f32 %v194, %v253
    %v255 = vpop.f32.mrf.mxu0
    %256 = vdwg.mxu0
    %v257 = vld [vmem:[#allocation7] sm:$0xf]
    %v258 = vld [vmem:[#allocation7 + $0x4] sm:$0xf]
    %v259 = vld [vmem:[#allocation7 + $0x8] sm:$0xf]
    %v260 = vld [vmem:[#allocation7 + $0xc] sm:$0xf]
    %v261 = vld [vmem:[#allocation7 + $0x10] sm:$0xf]
    %v262 = vld [vmem:[#allocation7 + $0x14] sm:$0xf]
    %v263 = vld [vmem:[#allocation7 + $0x18] sm:$0xf]
    %v264 = vld [vmem:[#allocation7 + $0x1c] sm:$0xf]
    %v265 = vld [vmem:[#allocation7 + $0x20] sm:$0xf]
    %v266 = vld [vmem:[#allocation7 + $0x24] sm:$0xf]
    %v267 = vld [vmem:[#allocation7 + $0x28] sm:$0xf]
    %v268 = vld [vmem:[#allocation7 + $0x2c] sm:$0xf]
    %v269 = vld [vmem:[#allocation7 + $0x30] sm:$0xf]
    %v270 = vld [vmem:[#allocation7 + $0x34] sm:$0xf]
    %v271 = vld [vmem:[#allocation7 + $0x38] sm:$0xf]
    %v272 = vld [vmem:[#allocation7 + $0x3c] sm:$0xf]
    %v273 = vld [vmem:[%s4] sm:$0x1]
    %v274 = vpack.c.bf16 %v254, %v254
    %v276 = vperm.slane %v273, 0
    %v294 = vunpack.c.l.b16 %v257
    %v295 = vunpack.c.l.b16 %v258
    %v296 = vunpack.c.l.b16 %v259
    %v297 = vunpack.c.l.b16 %v260
    %v298 = vunpack.c.l.b16 %v261
    %v299 = vunpack.c.l.b16 %v262
    %v300 = vunpack.c.l.b16 %v263
    %v301 = vunpack.c.l.b16 %v264
    %v302 = vunpack.c.l.b16 %v265
    %v303 = vunpack.c.l.b16 %v266
    %v304 = vunpack.c.l.b16 %v267
    %v305 = vunpack.c.l.b16 %v268
    %v306 = vunpack.c.l.b16 %v269
    %v307 = vunpack.c.l.b16 %v270
    %v308 = vunpack.c.l.b16 %v271
    %v309 = vunpack.c.l.b16 %v272
    %v310 = vpack.c.b16 %v295, %v294
    %v311 = vpack.c.b16 %v297, %v296
    %v312 = vpack.c.b16 %v299, %v298
    %v313 = vpack.c.b16 %v301, %v300
    %v314 = vpack.c.b16 %v303, %v302
    %v315 = vpack.c.b16 %v305, %v304
    %v316 = vpack.c.b16 %v307, %v306
    %v317 = vpack.c.b16 %v309, %v308
    %326 = vmatpush.bf16.msra.mxu0 %v317
    %327 = vmatpush.bf16.msra.mxu0 %v316
    %328 = vmatpush.bf16.msra.mxu0 %v315
    %329 = vmatpush.bf16.msra.mxu0 %v314
    %330 = vmatpush.bf16.msra.mxu0 %v313
    %331 = vmatpush.bf16.msra.mxu0 %v312
    %332 = vmatpush.bf16.msra.mxu0 %v311
    %333 = vmatpush.bf16.msra.mxu0 %v310
    %334 = vmatmul.bf16.gmra.mxu0 %v274
    %v335 = vpop.f32.mrf.mxu0
    %v336 = vadd.f32 %v276, %v335
    %v337 = vpop.f32.mrf.mxu0
    %338 = vdwg.mxu0
    %v339 = vld [vmem:[#allocation8] sm:$0xf]
    %v340 = vld [vmem:[#allocation8 + $0x4] sm:$0xf]
    %v341 = vld [vmem:[#allocation8 + $0x8] sm:$0xf]
    %v342 = vld [vmem:[#allocation8 + $0xc] sm:$0xf]
    %v343 = vld [vmem:[#allocation8 + $0x10] sm:$0xf]
    %v344 = vld [vmem:[#allocation8 + $0x14] sm:$0xf]
    %v345 = vld [vmem:[#allocation8 + $0x18] sm:$0xf]
    %v346 = vld [vmem:[#allocation8 + $0x1c] sm:$0xf]
    %v347 = vld [vmem:[#allocation8 + $0x20] sm:$0xf]
    %v348 = vld [vmem:[#allocation8 + $0x24] sm:$0xf]
    %v349 = vld [vmem:[#allocation8 + $0x28] sm:$0xf]
    %v350 = vld [vmem:[#allocation8 + $0x2c] sm:$0xf]
    %v351 = vld [vmem:[#allocation8 + $0x30] sm:$0xf]
    %v352 = vld [vmem:[#allocation8 + $0x34] sm:$0xf]
    %v353 = vld [vmem:[#allocation8 + $0x38] sm:$0xf]
    %v354 = vld [vmem:[#allocation8 + $0x3c] sm:$0xf]
    %v355 = vld [vmem:[%s6] sm:$0x1]
    %v356 = vpack.c.bf16 %v336, %v336
    %v358 = vperm.slane %v355, 0
    %v376 = vunpack.c.l.b16 %v339
    %v377 = vunpack.c.l.b16 %v340
    %v378 = vunpack.c.l.b16 %v341
    %v379 = vunpack.c.l.b16 %v342
    %v380 = vunpack.c.l.b16 %v343
    %v381 = vunpack.c.l.b16 %v344
    %v382 = vunpack.c.l.b16 %v345
    %v383 = vunpack.c.l.b16 %v346
    %v384 = vunpack.c.l.b16 %v347
    %v385 = vunpack.c.l.b16 %v348
    %v386 = vunpack.c.l.b16 %v349
    %v387 = vunpack.c.l.b16 %v350
    %v388 = vunpack.c.l.b16 %v351
    %v389 = vunpack.c.l.b16 %v352
    %v390 = vunpack.c.l.b16 %v353
    %v391 = vunpack.c.l.b16 %v354
    %v392 = vpack.c.b16 %v377, %v376
    %v393 = vpack.c.b16 %v379, %v378
    %v394 = vpack.c.b16 %v381, %v380
    %v395 = vpack.c.b16 %v383, %v382
    %v396 = vpack.c.b16 %v385, %v384
    %v397 = vpack.c.b16 %v387, %v386
    %v398 = vpack.c.b16 %v389, %v388
    %v399 = vpack.c.b16 %v391, %v390
    %408 = vmatpush.bf16.msra.mxu0 %v399
    %409 = vmatpush.bf16.msra.mxu0 %v398
    %410 = vmatpush.bf16.msra.mxu0 %v397
    %411 = vmatpush.bf16.msra.mxu0 %v396
    %412 = vmatpush.bf16.msra.mxu0 %v395
    %413 = vmatpush.bf16.msra.mxu0 %v394
    %414 = vmatpush.bf16.msra.mxu0 %v393
    %415 = vmatpush.bf16.msra.mxu0 %v392
    %416 = vmatmul.bf16.gmra.mxu0 %v356
    %v417 = vpop.f32.mrf.mxu0
    %v418 = vadd.f32 %v358, %v417
    %v419 = vpop.f32.mrf.mxu0
    %420 = vdwg.mxu0
    %v421 = vtanh.pop %v418
    %v422 = vld [vmem:[#allocation10] sm:$0xf]
    %v423 = vld [vmem:[#allocation10 + $0x4] sm:$0xf]
    %v424 = vld [vmem:[#allocation10 + $0x8] sm:$0xf]
    %v425 = vld [vmem:[#allocation10 + $0xc] sm:$0xf]
    %v426 = vld [vmem:[#allocation10 + $0x10] sm:$0xf]
    %v427 = vld [vmem:[#allocation10 + $0x14] sm:$0xf]
    %v428 = vld [vmem:[#allocation10 + $0x18] sm:$0xf]
    %v429 = vld [vmem:[#allocation10 + $0x1c] sm:$0xf]
    %v430 = vld [vmem:[#allocation10 + $0x20] sm:$0xf]
    %v431 = vld [vmem:[#allocation10 + $0x24] sm:$0xf]
    %v432 = vld [vmem:[#allocation10 + $0x28] sm:$0xf]
    %v433 = vld [vmem:[#allocation10 + $0x2c] sm:$0xf]
    %v434 = vld [vmem:[#allocation10 + $0x30] sm:$0xf]
    %v435 = vld [vmem:[#allocation10 + $0x34] sm:$0xf]
    %v436 = vld [vmem:[#allocation10 + $0x38] sm:$0xf]
    %v437 = vld [vmem:[#allocation10 + $0x3c] sm:$0xf]
    %v438 = vld [vmem:[%s8] sm:$0x1]
    %v439 = vpack.c.bf16 %v421, %v421
    %v441 = vperm.slane %v438, 0
    %v459 = vunpack.c.l.b16 %v422
    %v460 = vunpack.c.l.b16 %v423
    %v461 = vunpack.c.l.b16 %v424
    %v462 = vunpack.c.l.b16 %v425
    %v463 = vunpack.c.l.b16 %v426
    %v464 = vunpack.c.l.b16 %v427
    %v465 = vunpack.c.l.b16 %v428
    %v466 = vunpack.c.l.b16 %v429
    %v467 = vunpack.c.l.b16 %v430
    %v468 = vunpack.c.l.b16 %v431
    %v469 = vunpack.c.l.b16 %v432
    %v470 = vunpack.c.l.b16 %v433
    %v471 = vunpack.c.l.b16 %v434
    %v472 = vunpack.c.l.b16 %v435
    %v473 = vunpack.c.l.b16 %v436
    %v474 = vunpack.c.l.b16 %v437
    %v475 = vpack.c.b16 %v460, %v459
    %v476 = vpack.c.b16 %v462, %v461
    %v477 = vpack.c.b16 %v464, %v463
    %v478 = vpack.c.b16 %v466, %v465
    %v479 = vpack.c.b16 %v468, %v467
    %v480 = vpack.c.b16 %v470, %v469
    %v481 = vpack.c.b16 %v472, %v471
    %v482 = vpack.c.b16 %v474, %v473
    %491 = vmatpush.bf16.msra.mxu0 %v482
    %492 = vmatpush.bf16.msra.mxu0 %v481
    %493 = vmatpush.bf16.msra.mxu0 %v480
    %494 = vmatpush.bf16.msra.mxu0 %v479
    %495 = vmatpush.bf16.msra.mxu0 %v478
    %496 = vmatpush.bf16.msra.mxu0 %v477
    %497 = vmatpush.bf16.msra.mxu0 %v476
    %498 = vmatpush.bf16.msra.mxu0 %v475
    %499 = vmatmul.bf16.gmra.mxu0 %v439
    %v500 = vpop.f32.mrf.mxu0
    %v501 = vadd.f32 %v441, %v500
    %v502 = vpop.f32.mrf.mxu0
    %503 = vdwg.mxu0
    %v504 = vtanh.pop %v501
    %v505 = vld [vmem:[#allocation11] sm:$0xf]
    %v506 = vld [vmem:[#allocation11 + $0x4] sm:$0xf]
    %v507 = vld [vmem:[#allocation11 + $0x8] sm:$0xf]
    %v508 = vld [vmem:[#allocation11 + $0xc] sm:$0xf]
    %v509 = vld [vmem:[#allocation11 + $0x10] sm:$0xf]
    %v510 = vld [vmem:[#allocation11 + $0x14] sm:$0xf]
    %v511 = vld [vmem:[#allocation11 + $0x18] sm:$0xf]
    %v512 = vld [vmem:[#allocation11 + $0x1c] sm:$0xf]
    %v513 = vld [vmem:[#allocation11 + $0x20] sm:$0xf]
    %v514 = vld [vmem:[#allocation11 + $0x24] sm:$0xf]
    %v515 = vld [vmem:[#allocation11 + $0x28] sm:$0xf]
    %v516 = vld [vmem:[#allocation11 + $0x2c] sm:$0xf]
    %v517 = vld [vmem:[#allocation11 + $0x30] sm:$0xf]
    %v518 = vld [vmem:[#allocation11 + $0x34] sm:$0xf]
    %v519 = vld [vmem:[#allocation11 + $0x38] sm:$0xf]
    %v520 = vld [vmem:[#allocation11 + $0x3c] sm:$0xf]
    %v521 = vld [vmem:[%s10] sm:$0x1]
    %v522 = vpack.c.bf16 %v504, %v504
    %v524 = vperm.slane %v521, 0
    %v542 = vunpack.c.l.b16 %v505
    %v543 = vunpack.c.l.b16 %v506
    %v544 = vunpack.c.l.b16 %v507
    %v545 = vunpack.c.l.b16 %v508
    %v546 = vunpack.c.l.b16 %v509
    %v547 = vunpack.c.l.b16 %v510
    %v548 = vunpack.c.l.b16 %v511
    %v549 = vunpack.c.l.b16 %v512
    %v550 = vunpack.c.l.b16 %v513
    %v551 = vunpack.c.l.b16 %v514
    %v552 = vunpack.c.l.b16 %v515
    %v553 = vunpack.c.l.b16 %v516
    %v554 = vunpack.c.l.b16 %v517
    %v555 = vunpack.c.l.b16 %v518
    %v556 = vunpack.c.l.b16 %v519
    %v557 = vunpack.c.l.b16 %v520
    %v558 = vpack.c.b16 %v543, %v542
    %v559 = vpack.c.b16 %v545, %v544
    %v560 = vpack.c.b16 %v547, %v546
    %v561 = vpack.c.b16 %v549, %v548
    %v562 = vpack.c.b16 %v551, %v550
    %v563 = vpack.c.b16 %v553, %v552
    %v564 = vpack.c.b16 %v555, %v554
    %v565 = vpack.c.b16 %v557, %v556
    %574 = vmatpush.bf16.msra.mxu0 %v565
    %575 = vmatpush.bf16.msra.mxu0 %v564
    %576 = vmatpush.bf16.msra.mxu0 %v563
    %577 = vmatpush.bf16.msra.mxu0 %v562
    %578 = vmatpush.bf16.msra.mxu0 %v561
    %579 = vmatpush.bf16.msra.mxu0 %v560
    %580 = vmatpush.bf16.msra.mxu0 %v559
    %581 = vmatpush.bf16.msra.mxu0 %v558
    %582 = vmatmul.bf16.gmra.mxu0 %v522
    %v583 = vpop.f32.mrf.mxu0
    %v584 = vadd.f32 %v524, %v583
    %v585 = vpop.f32.mrf.mxu0
    %586 = vdwg.mxu0
    %v587 = vtanh.pop %v584
    %v588 = vld [vmem:[#allocation13] sm:$0xf]
    %v589 = vld [vmem:[#allocation13 + $0x4] sm:$0xf]
    %v590 = vld [vmem:[#allocation13 + $0x8] sm:$0xf]
    %v591 = vld [vmem:[#allocation13 + $0xc] sm:$0xf]
    %v592 = vld [vmem:[#allocation13 + $0x10] sm:$0xf]
    %v593 = vld [vmem:[#allocation13 + $0x14] sm:$0xf]
    %v594 = vld [vmem:[#allocation13 + $0x18] sm:$0xf]
    %v595 = vld [vmem:[#allocation13 + $0x1c] sm:$0xf]
    %v596 = vld [vmem:[#allocation13 + $0x20] sm:$0xf]
    %v597 = vld [vmem:[#allocation13 + $0x24] sm:$0xf]
    %v598 = vld [vmem:[#allocation13 + $0x28] sm:$0xf]
    %v599 = vld [vmem:[#allocation13 + $0x2c] sm:$0xf]
    %v600 = vld [vmem:[#allocation13 + $0x30] sm:$0xf]
    %v601 = vld [vmem:[#allocation13 + $0x34] sm:$0xf]
    %v602 = vld [vmem:[#allocation13 + $0x38] sm:$0xf]
    %v603 = vld [vmem:[#allocation13 + $0x3c] sm:$0xf]
    %v604 = vld [vmem:[%s12] sm:$0x1]
    %v605 = vpack.c.bf16 %v587, %v587
    %v607 = vperm.slane %v604, 0
    %v625 = vunpack.c.l.b16 %v588
    %v626 = vunpack.c.l.b16 %v589
    %v627 = vunpack.c.l.b16 %v590
    %v628 = vunpack.c.l.b16 %v591
    %v629 = vunpack.c.l.b16 %v592
    %v630 = vunpack.c.l.b16 %v593
    %v631 = vunpack.c.l.b16 %v594
    %v632 = vunpack.c.l.b16 %v595
    %v633 = vunpack.c.l.b16 %v596
    %v634 = vunpack.c.l.b16 %v597
    %v635 = vunpack.c.l.b16 %v598
    %v636 = vunpack.c.l.b16 %v599
    %v637 = vunpack.c.l.b16 %v600
    %v638 = vunpack.c.l.b16 %v601
    %v639 = vunpack.c.l.b16 %v602
    %v640 = vunpack.c.l.b16 %v603
    %v641 = vpack.c.b16 %v626, %v625
    %v642 = vpack.c.b16 %v628, %v627
    %v643 = vpack.c.b16 %v630, %v629
    %v644 = vpack.c.b16 %v632, %v631
    %v645 = vpack.c.b16 %v634, %v633
    %v646 = vpack.c.b16 %v636, %v635
    %v647 = vpack.c.b16 %v638, %v637
    %v648 = vpack.c.b16 %v640, %v639
    %657 = vmatpush.bf16.msra.mxu0 %v648
    %658 = vmatpush.bf16.msra.mxu0 %v647
    %659 = vmatpush.bf16.msra.mxu0 %v646
    %660 = vmatpush.bf16.msra.mxu0 %v645
    %661 = vmatpush.bf16.msra.mxu0 %v644
    %662 = vmatpush.bf16.msra.mxu0 %v643
    %663 = vmatpush.bf16.msra.mxu0 %v642
    %664 = vmatpush.bf16.msra.mxu0 %v641
    %665 = vmatmul.bf16.gmra.mxu0 %v605
    %v666 = vpop.f32.mrf.mxu0
    %v667 = vadd.f32 %v607, %v666
    %v668 = vpop.f32.mrf.mxu0
    %669 = vdwg.mxu0
    %v670 = vld [vmem:[#allocation14] sm:$0xf]
    %v671 = vld [vmem:[#allocation14 + $0x4] sm:$0xf]
    %v672 = vld [vmem:[#allocation14 + $0x8] sm:$0xf]
    %v673 = vld [vmem:[#allocation14 + $0xc] sm:$0xf]
    %v674 = vld [vmem:[#allocation14 + $0x10] sm:$0xf]
    %v675 = vld [vmem:[#allocation14 + $0x14] sm:$0xf]
    %v676 = vld [vmem:[#allocation14 + $0x18] sm:$0xf]
    %v677 = vld [vmem:[#allocation14 + $0x1c] sm:$0xf]
    %v678 = vld [vmem:[#allocation14 + $0x20] sm:$0xf]
    %v679 = vld [vmem:[#allocation14 + $0x24] sm:$0xf]
    %v680 = vld [vmem:[#allocation14 + $0x28] sm:$0xf]
    %v681 = vld [vmem:[#allocation14 + $0x2c] sm:$0xf]
    %v682 = vld [vmem:[#allocation14 + $0x30] sm:$0xf]
    %v683 = vld [vmem:[#allocation14 + $0x34] sm:$0xf]
    %v684 = vld [vmem:[#allocation14 + $0x38] sm:$0xf]
    %v685 = vld [vmem:[#allocation14 + $0x3c] sm:$0xf]
    %v686 = vld [vmem:[%s14] sm:$0x1]
    %v687 = vpack.c.bf16 %v667, %v667
    %v689 = vperm.slane %v686, 0
    %v707 = vunpack.c.l.b16 %v670
    %v708 = vunpack.c.l.b16 %v671
    %v709 = vunpack.c.l.b16 %v672
    %v710 = vunpack.c.l.b16 %v673
    %v711 = vunpack.c.l.b16 %v674
    %v712 = vunpack.c.l.b16 %v675
    %v713 = vunpack.c.l.b16 %v676
    %v714 = vunpack.c.l.b16 %v677
    %v715 = vunpack.c.l.b16 %v678
    %v716 = vunpack.c.l.b16 %v679
    %v717 = vunpack.c.l.b16 %v680
    %v718 = vunpack.c.l.b16 %v681
    %v719 = vunpack.c.l.b16 %v682
    %v720 = vunpack.c.l.b16 %v683
    %v721 = vunpack.c.l.b16 %v684
    %v722 = vunpack.c.l.b16 %v685
    %v723 = vpack.c.b16 %v708, %v707
    %v724 = vpack.c.b16 %v710, %v709
    %v725 = vpack.c.b16 %v712, %v711
    %v726 = vpack.c.b16 %v714, %v713
    %v727 = vpack.c.b16 %v716, %v715
    %v728 = vpack.c.b16 %v718, %v717
    %v729 = vpack.c.b16 %v720, %v719
    %v730 = vpack.c.b16 %v722, %v721
    %739 = vmatpush.bf16.msra.mxu0 %v730
    %740 = vmatpush.bf16.msra.mxu0 %v729
    %741 = vmatpush.bf16.msra.mxu0 %v728
    %742 = vmatpush.bf16.msra.mxu0 %v727
    %743 = vmatpush.bf16.msra.mxu0 %v726
    %744 = vmatpush.bf16.msra.mxu0 %v725
    %745 = vmatpush.bf16.msra.mxu0 %v724
    %746 = vmatpush.bf16.msra.mxu0 %v723
    %747 = vmatmul.bf16.gmra.mxu0 %v687
    %v748 = vpop.f32.mrf.mxu0
    %v749 = vadd.f32 %v689, %v748
    %v750 = vpop.f32.mrf.mxu0
    %751 = vdwg.mxu0
    %752 = vst [vmem:[#allocation16] sm:$0xff] %v749
    // Predicated region
    $region94: #{tpu_custom_call.1} parent=1 // pred_check
      _
    $region95: #{tpu_custom_call.1} parent=1 // pred_check_branch
      %754 = sbr.rel (0) target = $region97
    $region96: #{tpu_custom_call.1} parent=1 // pred_region
      %756 = vsyncadd [#allocation4], 0
      %s758 = sshll.u32 [#allocation16], 4
      %s759 = int_to_ptr.vmem [resolvable:$true] %s758
      %s760 = sshll.u32 %s15, 4
      %s761 = int_to_ptr.hbm [resolvable:$true] %s760
      %763 = dma.vmem_to_hbm [thread:$0]  %s759, 128, %s761, [#allocation4]
    $region97: #{tpu_custom_call.1} parent=1 // pred_fallthru
      _
    // Predicated region
    $region98: #{tpu_custom_call.1} parent=1 // pred_check
      _
    $region99: #{tpu_custom_call.1} parent=1 // pred_check_branch
      %765 = sbr.rel (0) target = $region101
    $region100: #{tpu_custom_call.1} parent=1 // pred_region
      %767 = dma.done [#allocation4], 128
    $region101: #{tpu_custom_call.1} parent=1 // pred_fallthru
      _
    %768 = vsyncpa [#allocation3], 1
    %769 = vsyncpa [#allocation6], 1
    %770 = vsyncpa [#allocation9], 1
    %771 = vsyncpa [#allocation12], 1
    %772 = vsyncpa [#allocation15], 1
    %773 = vsyncpa [#allocation4], 1

</llo_original>
